<compile_context>
chip_gen: v7x
topology: tpu7x:2x2x1
jax: 0.10.0
libtpu: 0.0.40
codegen_flags: <defaults>
</compile_context>

<pallas_src>
from functools import partial

import jax
import jax.numpy as jnp
from jax.experimental import pallas as pl
from jax.experimental.pallas import tpu as pltpu

LANE = 128


def _focal_kernel(gamma_ref, x_ref, t_ref, o_ref, *, valid_rows, need_mask,
                  hard_labels):
    tr = x_ref.shape[0]

    x = x_ref[...].astype(jnp.float32)
    t = t_ref[...].astype(jnp.float32)
    gamma = gamma_ref[0]

    xt = x * t
    z = x - 2.0 * xt  # == -x * (2t - 1)

    if hard_labels:
        # For t in {0,1}, |z| == |x|: share the softplus term (3 transcendentals).
        sp = jnp.log1p(jnp.exp(-jnp.abs(x)))
        bce = jnp.maximum(x, 0.0) - xt + sp
        invprobs = jnp.minimum(z, 0.0) - sp
    else:
        # General (soft-target) path:
        #   bce      = max(x,0) - x*t + log1p(exp(-|x|))   (stable BCE-with-logits)
        #   invprobs = logsigmoid(z) = min(z,0) - log1p(exp(-|z|))
        bce = jnp.maximum(x, 0.0) - xt + jnp.log1p(jnp.exp(-jnp.abs(x)))
        invprobs = jnp.minimum(z, 0.0) - jnp.log1p(jnp.exp(-jnp.abs(z)))

    loss = jnp.exp(invprobs * gamma) * bce

    def _reduce(v):
        # (8,128)-tile-aligned partial reduction; stays on the VPU (no XLU).
        return jnp.sum(v.reshape(tr // 8, 8, LANE), axis=0)

    if need_mask:
        i = pl.program_id(0)
        last = pl.num_programs(0) - 1

        @pl.when(i < last)
        def _():
            o_ref[...] = _reduce(loss)

        @pl.when(i == last)
        def _():
            # Row-level mask only (row index fits int32 far past 2^31 elements).
            row0 = i * tr
            r = jax.lax.broadcasted_iota(jnp.int32, loss.shape, 0)
            # Keep this a select: garbage (possibly NaN/Inf) rows must not propagate.
            o_ref[...] = _reduce(jnp.where(row0 + r < valid_rows, loss, 0.0))
    else:
        o_ref[...] = _reduce(loss)


def _focal_elems(x, t, gamma):
    """Plain-JAX per-element focal loss (used for the <128-element tail)."""
    x = x.astype(jnp.float32)
    t = t.astype(jnp.float32)
    xt = x * t
    z = x - 2.0 * xt
    bce = jnp.maximum(x, 0.0) - xt + jnp.log1p(jnp.exp(-jnp.abs(x)))
    invprobs = jnp.minimum(z, 0.0) - jnp.log1p(jnp.exp(-jnp.abs(z)))
    return jnp.exp(invprobs * jnp.float32(gamma)) * bce


def focal_loss(x, target, gamma, tile_rows=4096, hard_labels=False):
    if x.shape != target.shape:
        raise ValueError(
            "Target size ({}) must be the same as input size ({})".format(
                target.shape, x.shape
            )
        )

    n = x.size
    xf = x.reshape(-1)
    tf = target.reshape(-1)

    n_main = (n // LANE) * LANE
    n_tail = n - n_main

    total = jnp.float32(0.0)

    if n_main:
        rows = n_main // LANE
        if n_tail:
            x_main, t_main = xf[:n_main], tf[:n_main]
        else:
            x_main, t_main = xf, tf  # no slice, no copy when lane-aligned
        x2 = x_main.reshape(rows, LANE)
        t2 = t_main.reshape(rows, LANE)

        # Tile rows: multiple of 8, clamped to the array, large by default.
        tr = min(tile_rows, rows)
        tr = max(8, (tr // 8) * 8)
        num_blocks = pl.cdiv(rows, tr)
        need_mask = (rows % tr) != 0

        g_arr = jnp.array([gamma], dtype=jnp.float32)

        in_spec = pl.BlockSpec((tr, LANE), lambda i, g_ref: (i, 0))
        out_spec = pl.BlockSpec((None, 8, LANE), lambda i, g_ref: (i, 0, 0))

        # 2 inputs x 2 pipeline buffers x tile bytes, plus headroom for outputs
        # and compiler-internal scratch. Safe on v5e/v6e/v7x up to tile_rows=8192.
        elem_bytes = max(x2.dtype.itemsize, 4)
        vmem_limit = 2 * 2 * tr * LANE * elem_bytes + (8 << 20)

        kernel = partial(
            _focal_kernel,
            valid_rows=rows,
            need_mask=need_mask,
            hard_labels=hard_labels,
        )

        partials = pl.pallas_call(
            kernel,
            out_shape=jax.ShapeDtypeStruct((num_blocks, 8, LANE), jnp.float32),
            grid_spec=pltpu.PrefetchScalarGridSpec(
                num_scalar_prefetch=1,
                grid=(num_blocks,),
                in_specs=[in_spec, in_spec],
                out_specs=out_spec,
            ),
            compiler_params=pltpu.CompilerParams(
                dimension_semantics=("parallel",),
                vmem_limit_bytes=vmem_limit,
            ),
        )(g_arr, x2, t2)
        total = total + jnp.sum(partials)

    if n_tail:
        total = total + jnp.sum(_focal_elems(xf[n_main:], tf[n_main:], gamma))

    return total / jnp.float32(n)


def _focal_loss_ref(x, target, gamma):
    # Literal transcription of the PyTorch forward.
    x = x.astype(jnp.float32)
    t = target.astype(jnp.float32)
    max_val = jnp.maximum(-x, 0.0)
    loss = x - x * t + max_val + jnp.log(jnp.exp(-max_val) + jnp.exp(-x - max_val))
    invprobs = jax.nn.log_sigmoid(-x * (t * 2.0 - 1.0))
    loss = jnp.exp(invprobs * gamma) * loss
    return loss.mean()


if __name__ == "__main__":
    key = jax.random.PRNGKey(0)
    gamma = 2.0

    # Main case: lane-aligned (B,C,H,W) = (2,4,16,16) -> n = 2048.
    k1, k2, key = jax.random.split(key, 3)
    logits = jax.random.normal(k1, (2, 4, 16, 16), dtype=jnp.float32)
    targets = (jax.random.uniform(k2, (2, 4, 16, 16)) > 0.5).astype(jnp.float32)

    out = jax.block_until_ready(focal_loss(logits, targets, gamma))
    ref = _focal_loss_ref(logits, targets, gamma)
    assert jnp.allclose(out, ref, rtol=1e-5, atol=1e-6), (out, ref)

    # Hard-label fast path (valid here: targets are 0/1).
    out_h = jax.block_until_ready(focal_loss(logits, targets, gamma, hard_labels=True))
    assert jnp.allclose(out_h, ref, rtol=1e-5, atol=1e-6), (out_h, ref)

    # Ragged case: exercises partial last block (rows % tr != 0) + lane tail.
    k3, k4, key = jax.random.split(key, 3)
    n_ragged = 17 * LANE + 5
    xr = jax.random.normal(k3, (n_ragged,), dtype=jnp.float32)
    tr_ = (jax.random.uniform(k4, (n_ragged,)) > 0.5).astype(jnp.float32)
    out_r = jax.block_until_ready(focal_loss(xr, tr_, gamma, tile_rows=8))
    ref_r = _focal_loss_ref(xr, tr_, gamma)
    assert jnp.allclose(out_r, ref_r, rtol=1e-5, atol=1e-6), (out_r, ref_r)

    # Tiny case: fewer than 128 elements -> pure JAX tail path.
    k5, k6, _ = jax.random.split(key, 3)
    xs = jax.random.normal(k5, (3, 5, 7), dtype=jnp.float32)
    ts = (jax.random.uniform(k6, (3, 5, 7)) > 0.5).astype(jnp.float32)
    out_s = jax.block_until_ready(focal_loss(xs, ts, gamma))
    ref_s = _focal_loss_ref(xs, ts, gamma)
    assert jnp.allclose(out_s, ref_s, rtol=1e-5, atol=1e-6), (out_s, ref_s)

    print("KERNEL_OK")
</pallas_src>

<mosaic_0001>
module attributes {stable_mosaic.version = 11 : i64} {
  func.func @_focal_kernel(%arg0: i32, %arg1: memref<1xf32, #tpu.memory_space<smem>>, %arg2: memref<16x128xf32, #tpu.memory_space<vmem>>, %arg3: memref<16x128xf32, #tpu.memory_space<vmem>>, %arg4: memref<1x8x128xf32, #tpu.memory_space<vmem>>) attributes {dimension_semantics = [#tpu.dimension_semantics<parallel>], iteration_bounds = array<i64: 1>, scalar_prefetch = 1 : i64, scratch_operands = 0 : i64, tpu.core_type = #tpu.core_type<tc>, window_params = [{transform_indices = @transform_0, window_bounds = array<i64: 16, 128>}, {transform_indices = @transform_1, window_bounds = array<i64: 16, 128>}, {transform_indices = @transform_2, window_bounds = array<i64: 1, 8, 128>}]} {
    %c0 = arith.constant 0 : index
    %c0_0 = arith.constant 0 : index
    %0 = vector.load %arg2[%c0, %c0_0] : memref<16x128xf32, #tpu.memory_space<vmem>>, vector<16x128xf32>
    %c0_1 = arith.constant 0 : index
    %c0_2 = arith.constant 0 : index
    %1 = vector.load %arg3[%c0_1, %c0_2] : memref<16x128xf32, #tpu.memory_space<vmem>>, vector<16x128xf32>
    %c0_3 = arith.constant 0 : index
    %2 = memref.load %arg1[%c0_3] : memref<1xf32, #tpu.memory_space<smem>>
    %3 = arith.mulf %0, %1 : vector<16x128xf32>
    %cst = arith.constant 2.000000e+00 : f32
    %4 = vector.broadcast %cst : f32 to vector<16x128xf32>
    %5 = arith.mulf %4, %3 : vector<16x128xf32>
    %6 = arith.subf %0, %5 : vector<16x128xf32>
    %cst_4 = arith.constant 0.000000e+00 : f32
    %7 = vector.broadcast %cst_4 : f32 to vector<16x128xf32>
    %8 = arith.maximumf %0, %7 : vector<16x128xf32>
    %9 = arith.subf %8, %3 : vector<16x128xf32>
    %10 = math.absf %0 : vector<16x128xf32>
    %cst_5 = arith.constant 0.000000e+00 : f32
    %11 = vector.broadcast %cst_5 : f32 to vector<16x128xf32>
    %12 = arith.subf %11, %10 : vector<16x128xf32>
    %13 = math.exp %12 : vector<16x128xf32>
    %14 = math.log1p %13 : vector<16x128xf32>
    %15 = arith.addf %9, %14 : vector<16x128xf32>
    %cst_6 = arith.constant 0.000000e+00 : f32
    %16 = vector.broadcast %cst_6 : f32 to vector<16x128xf32>
    %17 = arith.minimumf %6, %16 : vector<16x128xf32>
    %18 = math.absf %6 : vector<16x128xf32>
    %cst_7 = arith.constant 0.000000e+00 : f32
    %19 = vector.broadcast %cst_7 : f32 to vector<16x128xf32>
    %20 = arith.subf %19, %18 : vector<16x128xf32>
    %21 = math.exp %20 : vector<16x128xf32>
    %22 = math.log1p %21 : vector<16x128xf32>
    %23 = arith.subf %17, %22 : vector<16x128xf32>
    %24 = vector.broadcast %2 : f32 to vector<16x128xf32>
    %25 = arith.mulf %23, %24 : vector<16x128xf32>
    %26 = math.exp %25 : vector<16x128xf32>
    %27 = arith.mulf %26, %15 : vector<16x128xf32>
    %28 = vector.shape_cast %27 : vector<16x128xf32> to vector<2x8x128xf32>
    %cst_8 = arith.constant dense<0.000000e+00> : vector<8x128xf32>
    %29 = vector.multi_reduction <add>, %28, %cst_8 [0] : vector<2x8x128xf32> to vector<8x128xf32>
    %c0_9 = arith.constant 0 : index
    %c0_10 = arith.constant 0 : index
    %c0_11 = arith.constant 0 : index
    %30 = vector.load %arg4[%c0_9, %c0_10, %c0_11] : memref<1x8x128xf32, #tpu.memory_space<vmem>>, vector<1x8x128xf32>
    %31 = vector.shape_cast %30 : vector<1x8x128xf32> to vector<8x128xf32>
    %32 = vector.shape_cast %29 : vector<8x128xf32> to vector<1x8x128xf32>
    tpu.vector_store %arg4[%c0_9, %c0_10, %c0_11], %32 {strides = array<i32>} : memref<1x8x128xf32, #tpu.memory_space<vmem>>, vector<1x8x128xf32>,
    return
  }
  func.func @transform_0(%arg0: i32, %arg1: memref<1xf32, #tpu.memory_space<smem>>) -> (i32, i32) {
    %c0_i32 = arith.constant 0 : i32
    %c0_i32_0 = arith.constant 0 : i32
    return %arg0, %c0_i32 : i32, i32
  }
  func.func @transform_1(%arg0: i32, %arg1: memref<1xf32, #tpu.memory_space<smem>>) -> (i32, i32) {
    %c0_i32 = arith.constant 0 : i32
    %c0_i32_0 = arith.constant 0 : i32
    return %arg0, %c0_i32 : i32, i32
  }
  func.func @transform_2(%arg0: i32, %arg1: memref<1xf32, #tpu.memory_space<smem>>) -> (i32, i32, i32) {
    %c0_i32 = arith.constant 0 : i32
    %c0_i32_0 = arith.constant 0 : i32
    %c0_i32_1 = arith.constant 0 : i32
    return %arg0, %c0_i32, %c0_i32_0 : i32, i32, i32
  }
}

</mosaic_0001>

<llo_original>
// kernel: tpu_custom_call.1
$region0: #{tpu_custom_call.1}
  #allocation0 [shape = 'u32[]', space=smem, size = 0x4, offset = 0x4, fixed_abs, tag = 'smem constant byte address 0x4 - core index']
  #allocation1 [shape = 'u32[144,128]{1,0:T(1,128)}', space=vmem, size = 0x12000, scoped, tag = 'internal scratch']
  #allocation2 [shape = 's32[1]{0}', space=sflag, size = 0x4, scoped, tag = 'scoped memory for tpu_custom_call.1']
  #allocation3 [shape = 'f32[1]{0:T(128)S(6)}', space=smem, size = 0x200, scoped, tag = 'prefetched SMEM operand 0']
  %s0 = inlined_call_operand.<no memory space> [shape: f32[1], index: 0, kind: input, shape index: {}]
  %s1 = inlined_call_operand.hbm [shape: f32[16,128], index: 1, kind: input, shape index: {}]
  %s2 = inlined_call_operand.hbm [shape: f32[16,128], index: 2, kind: input, shape index: {}]
  %s3 = inlined_call_operand.hbm [shape: f32[1,8,128], index: 3, kind: output, shape index: {}]
  %s4 = sld [smem:[#allocation0]]
  $region26: #{tpu_custom_call.1} parent=0
    _
  %s6 = ssub.s32 1, %s4
  %s7 = scalar_select 0, %s6, %s4
  %8 = sst [smem:[#allocation3]] %s0
  $region1: #{tpu_custom_call.1} parent=0
    #allocation4 [shape = 'u8[8192]{0}', space=vmem, size = 0x2000, scoped, tag = 'input window, operand 1, single buffered']
    #allocation5 [shape = 's32[1]{0}', space=sflag, size = 0x4, scoped, tag = 'scoped memory for tpu_custom_call.1']
    #allocation6 [shape = 's32[1]{0}', space=sflag, size = 0x4, scoped, tag = 'scoped memory for tpu_custom_call.1']
    #allocation7 [shape = 'u8[8192]{0}', space=vmem, size = 0x2000, scoped, tag = 'input window, operand 2, single buffered']
    #allocation8 [shape = 's32[1]{0}', space=sflag, size = 0x4, scoped, tag = 'scoped memory for tpu_custom_call.1']
    #allocation9 [shape = 'u8[4096]{0}', space=vmem, size = 0x1000, scoped, tag = 'output window, operand 0, single buffered']
    %9 = vsyncpa [#allocation5], 0
    %10 = vsyncpa [#allocation8], 0
    %11 = vsyncpa [#allocation6], 0
    // Predicated region
    $region2: #{tpu_custom_call.1} parent=1 // pred_check
      _
    $region3: #{tpu_custom_call.1} parent=1 // pred_check_branch
      %13 = sbr.rel (0) target = $region5
    $region4: #{tpu_custom_call.1} parent=1 // pred_region
      %s15 = ssub.s32 256, 256
      %16 = vsyncadd [#allocation5], %s15
      %s17 = sshll.u32 [#allocation4], 4
      %s18 = int_to_ptr.vmem [resolvable:$true] %s17
      %23 = dma.hbm_to_vmem [thread:$0]  %s1, 256, %s18, [#allocation5], 128, 128, 8
    $region5: #{tpu_custom_call.1} parent=1 // pred_fallthru
      _
    // Predicated region
    $region6: #{tpu_custom_call.1} parent=1 // pred_check
      _
    $region7: #{tpu_custom_call.1} parent=1 // pred_check_branch
      %25 = sbr.rel (0) target = $region9
    $region8: #{tpu_custom_call.1} parent=1 // pred_region
      %s27 = ssub.s32 256, 256
      %28 = vsyncadd [#allocation8], %s27
      %s29 = sshll.u32 [#allocation7], 4
      %s30 = int_to_ptr.vmem [resolvable:$true] %s29
      %35 = dma.hbm_to_vmem [thread:$0]  %s2, 256, %s30, [#allocation8], 128, 128, 8
    $region9: #{tpu_custom_call.1} parent=1 // pred_fallthru
      _
    // Predicated region
    $region10: #{tpu_custom_call.1} parent=1 // pred_check
      _
    $region11: #{tpu_custom_call.1} parent=1 // pred_check_branch
      %37 = sbr.rel (0) target = $region13
    $region12: #{tpu_custom_call.1} parent=1 // pred_region
      %38 = dma.done [#allocation5], 256
    $region13: #{tpu_custom_call.1} parent=1 // pred_fallthru
      _
    // Predicated region
    $region14: #{tpu_custom_call.1} parent=1 // pred_check
      _
    $region15: #{tpu_custom_call.1} parent=1 // pred_check_branch
      %40 = sbr.rel (0) target = $region17
    $region16: #{tpu_custom_call.1} parent=1 // pred_region
      %41 = dma.done [#allocation8], 256
    $region17: #{tpu_custom_call.1} parent=1 // pred_fallthru
      _
    %v42 = vld [vmem:[#allocation4] sm:$0xff]
    %v43 = vld [vmem:[#allocation4 + $0x8] sm:$0xff]
    %v44 = vld [vmem:[#allocation7] sm:$0xff]
    %v45 = vld [vmem:[#allocation7 + $0x8] sm:$0xff]
    %s46 = sld [smem:[#allocation3]]
    %v47 = vmul.f32 %v42, %v44
    %v48 = vmul.f32 %v43, %v45
    %v49 = vmul.f32 %v47, 2.0
    %v50 = vmul.f32 %v48, 2.0
    %v51 = vsub.f32 %v42, %v49
    %v52 = vsub.f32 %v43, %v50
    %v53 = vmax.f32 %v42, 0.0
    %v54 = vmax.f32 %v43, 0.0
    %v55 = vsub.f32 %v53, %v47
    %v56 = vsub.f32 %v54, %v48
    %v57 = vand.u32 2147483647, %v42
    %v58 = vand.u32 2147483647, %v43
    %v59 = vsub.f32 0.0, %v57
    %v60 = vsub.f32 0.0, %v58
    %v61 = vmul.f32 %v59, 1.442695
    %v62 = vpow.pop %v61
    %v63 = vmul.f32 %v60, 1.442695
    %v64 = vpow.pop %v63
    %v65 = vadd.f32 %v62, 1.0
    %v66 = vlog2.pop %v65
    %v67 = vmul.f32 %v66, 0.6931472
    %v68 = vmul.f32 -0.5, %v62
    %v69 = vadd.f32 %v68, 1.0
    %v70 = vmul.f32 %v69, %v62
    %v71 = vand.u32 2147483647, %v62
    %vm72 = vcmp.lt.f32.partialorder %v71, 0.0004427343
    %v73 = vsel %vm72, %v70, %v67
    %v74 = vadd.f32 %v64, 1.0
    %v75 = vlog2.pop %v74
    %v76 = vmul.f32 %v75, 0.6931472
    %v77 = vmul.f32 -0.5, %v64
    %v78 = vadd.f32 %v77, 1.0
    %v79 = vmul.f32 %v78, %v64
    %v80 = vand.u32 2147483647, %v64
    %vm81 = vcmp.lt.f32.partialorder %v80, 0.0004427343
    %v82 = vsel %vm81, %v79, %v76
    %v83 = vadd.f32 %v55, %v73
    %v84 = vadd.f32 %v56, %v82
    %v85 = vmin.f32 %v51, 0.0
    %v86 = vmin.f32 %v52, 0.0
    %v87 = vand.u32 2147483647, %v51
    %v88 = vand.u32 2147483647, %v52
    %v89 = vsub.f32 0.0, %v87
    %v90 = vsub.f32 0.0, %v88
    %v91 = vmul.f32 %v89, 1.442695
    %v92 = vpow.pop %v91
    %v93 = vmul.f32 %v90, 1.442695
    %v94 = vpow.pop %v93
    %v95 = vadd.f32 %v92, 1.0
    %v96 = vlog2.pop %v95
    %v97 = vmul.f32 %v96, 0.6931472
    %v98 = vmul.f32 -0.5, %v92
    %v99 = vadd.f32 %v98, 1.0
    %v100 = vmul.f32 %v99, %v92
    %v101 = vand.u32 2147483647, %v92
    %vm102 = vcmp.lt.f32.partialorder %v101, 0.0004427343
    %v103 = vsel %vm102, %v100, %v97
    %v104 = vadd.f32 %v94, 1.0
    %v105 = vlog2.pop %v104
    %v106 = vmul.f32 %v105, 0.6931472
    %v107 = vmul.f32 -0.5, %v94
    %v108 = vadd.f32 %v107, 1.0
    %v109 = vmul.f32 %v108, %v94
    %v110 = vand.u32 2147483647, %v94
    %vm111 = vcmp.lt.f32.partialorder %v110, 0.0004427343
    %v112 = vsel %vm111, %v109, %v106
    %v113 = vsub.f32 %v85, %v103
    %v114 = vsub.f32 %v86, %v112
    %v115 = vstv %s46
    %v116 = vmul.f32 %v113, %v115
    %v117 = vmul.f32 %v114, %v115
    %v118 = vmul.f32 %v116, 1.442695
    %v119 = vpow.pop %v118
    %v120 = vmul.f32 %v117, 1.442695
    %v121 = vpow.pop %v120
    %v122 = vmul.f32 %v119, %v83
    %v123 = vmul.f32 %v121, %v84
    %v124 = vadd.f32 %v122, %v123
    %125 = vst [vmem:[#allocation9] sm:$0xff] %v124
    // Predicated region
    $region18: #{tpu_custom_call.1} parent=1 // pred_check
      _
    $region19: #{tpu_custom_call.1} parent=1 // pred_check_branch
      %127 = sbr.rel (0) target = $region21
    $region20: #{tpu_custom_call.1} parent=1 // pred_region
      %s129 = ssub.s32 128, 128
      %130 = vsyncadd [#allocation6], %s129
      %s132 = sshll.u32 [#allocation9], 4
      %s133 = int_to_ptr.vmem [resolvable:$true] %s132
      %135 = dma.vmem_to_hbm [thread:$0]  %s133, 128, %s3, [#allocation6]
    $region21: #{tpu_custom_call.1} parent=1 // pred_fallthru
      _
    // Predicated region
    $region22: #{tpu_custom_call.1} parent=1 // pred_check
      _
    $region23: #{tpu_custom_call.1} parent=1 // pred_check_branch
      %137 = sbr.rel (0) target = $region25
    $region24: #{tpu_custom_call.1} parent=1 // pred_region
      %138 = dma.done [#allocation6], 128
    $region25: #{tpu_custom_call.1} parent=1 // pred_fallthru
      _
    %139 = vsyncpa [#allocation5], 1
    %140 = vsyncpa [#allocation8], 1
    %141 = vsyncpa [#allocation6], 1

</llo_original>
